<compile_context>
chip_gen: v6e
topology: v6e:2x2x1
jax: 0.10.0
libtpu: 0.0.40
codegen_flags: <defaults>
</compile_context>

<pallas_src>
import jax
import jax.numpy as jnp
from jax.experimental import pallas as pl
from jax.experimental.pallas import tpu as pltpu


def cond_linear_kernel(x_ref, w_ref, b_ref, emb_ref, y_ref, o_ref):
    x = x_ref[...]                                     # (TB, num_in) f32

    # Linear: contract feature dims of x (TB, num_in) and w (num_out_p, num_in).
    lin = jax.lax.dot_general(
        x, w_ref[...],
        dimension_numbers=(((1,), (1,)), ((), ())),
        preferred_element_type=jnp.float32,
        precision=jax.lax.Precision.HIGHEST,           # match f32 GEMM accuracy
    ) + b_ref[...]                                     # (TB, num_out_p)

    # Embedding lookup as one-hot matmul: gamma = onehot(y) @ embed_table.
    # NOTE: out-of-range y silently yields gamma == 0 (PyTorch would raise).
    y = y_ref[...]                                     # (TB, 1) int32
    n_steps = emb_ref.shape[0]
    iota = jax.lax.broadcasted_iota(jnp.int32, (y.shape[0], n_steps), 1)
    onehot = (iota == y).astype(jnp.float32)           # (TB, n_steps) f32
    gamma = jnp.dot(onehot, emb_ref[...],
                    preferred_element_type=jnp.float32,
                    precision=jax.lax.Precision.HIGHEST)  # (TB, num_out_p)

    o_ref[...] = gamma * lin


def _round_up(v, m):
    return (v + m - 1) // m * m


def conditional_linear(x, w, b, emb, y, *, block_b=512):
    """x: (B, num_in) f32, w: (num_out, num_in) f32, b: (num_out,) f32,
    emb: (n_steps, num_out) f32, y: (B,) int -> (B, num_out) f32."""
    B, num_in = x.shape
    num_out = w.shape[0]
    n_steps = emb.shape[0]

    # ---- lane-dense output: pad num_out up to a multiple of 128 ------------
    num_out_p = _round_up(num_out, 128)
    if num_out_p != num_out:
        pad = num_out_p - num_out
        w = jnp.pad(w, ((0, pad), (0, 0)))       # zero rows -> zero output lanes
        b = jnp.pad(b, ((0, pad),))              # zero bias in padded lanes
        emb = jnp.pad(emb, ((0, 0), (0, pad)))   # zero gamma in padded lanes
    b2 = b.reshape(1, num_out_p)

    # ---- batch tile size: large, but VMEM-budgeted for all chip gens -------
    TB = min(block_b, _round_up(B, 8))
    resident_bytes = 4 * (num_out_p * num_in + num_out_p + n_steps * num_out_p)

    def tile_bytes(tb):  # double-buffered x/out tiles + y tile
        return 2 * 4 * tb * (num_in + num_out_p) + 2 * 4 * tb

    while TB > 8 and resident_bytes + tile_bytes(TB) > 8 * 1024 * 1024:
        TB //= 2
    TB = max(8, _round_up(TB, 8))

    # ---- pad batch so every grid step is a full tile ------------------------
    B_p = _round_up(B, TB)
    if B_p != B:
        x = jnp.pad(x, ((0, B_p - B), (0, 0)))
        y = jnp.pad(y, ((0, B_p - B),))          # pad index 0 is always valid
    y2 = y.astype(jnp.int32).reshape(B_p, 1)

    grid = (pl.cdiv(B_p, TB),)

    out = pl.pallas_call(
        cond_linear_kernel,
        out_shape=jax.ShapeDtypeStruct((B_p, num_out_p), jnp.float32),
        grid=grid,
        in_specs=[
            pl.BlockSpec((TB, num_in), lambda i: (i, 0)),          # streamed
            pl.BlockSpec((num_out_p, num_in), lambda i: (0, 0)),   # resident
            pl.BlockSpec((1, num_out_p), lambda i: (0, 0)),        # resident
            pl.BlockSpec((n_steps, num_out_p), lambda i: (0, 0)),  # resident
            pl.BlockSpec((TB, 1), lambda i: (i, 0)),               # streamed
        ],
        out_specs=pl.BlockSpec((TB, num_out_p), lambda i: (i, 0)),
        compiler_params=pltpu.CompilerParams(
            dimension_semantics=("parallel",)),
    )(x, w, b2, emb, y2)

    return out[:B, :num_out]


if __name__ == "__main__":
    # Module hyperparameters (small, consistent with the forward pass)
    B, num_in, num_out, n_steps = 8, 32, 32, 16

    key = jax.random.PRNGKey(0)
    k_x, k_y, k_w, k_b, k_e = jax.random.split(key, 5)

    # Deterministic parameter init (mirrors nn.Linear's uniform fan-in init
    # and nn.Embedding.weight.data.uniform_() in [0, 1)).
    bound = 1.0 / jnp.sqrt(jnp.float32(num_in))
    w = jax.random.uniform(k_w, (num_out, num_in), jnp.float32, -bound, bound)
    b = jax.random.uniform(k_b, (num_out,), jnp.float32, -bound, bound)
    emb = jax.random.uniform(k_e, (n_steps, num_out), jnp.float32, 0.0, 1.0)

    # Inputs
    x = jax.random.normal(k_x, (B, num_in), jnp.float32)
    y = jax.random.randint(k_y, (B,), 0, n_steps, jnp.int32)

    out = conditional_linear(x, w, b, emb, y)
    out = jax.block_until_ready(out)

    # Pure-JAX reference check
    ref = emb[y] * (x @ w.T + b)
    assert out.shape == (B, num_out)
    assert jnp.allclose(out, ref, atol=1e-5, rtol=1e-5), "mismatch vs reference"

    print("KERNEL_OK")
</pallas_src>

<mosaic_0001>
module attributes {stable_mosaic.version = 11 : i64} {
  func.func @cond_linear_kernel(%arg0: i32, %arg1: memref<8x32xf32, #tpu.memory_space<vmem>>, %arg2: memref<128x32xf32, #tpu.memory_space<vmem>>, %arg3: memref<1x128xf32, #tpu.memory_space<vmem>>, %arg4: memref<16x128xf32, #tpu.memory_space<vmem>>, %arg5: memref<8x1xi32, #tpu.memory_space<vmem>>, %arg6: memref<8x128xf32, #tpu.memory_space<vmem>>) attributes {dimension_semantics = [#tpu.dimension_semantics<parallel>], iteration_bounds = array<i64: 1>, scalar_prefetch = 0 : i64, scratch_operands = 0 : i64, tpu.core_type = #tpu.core_type<tc>, window_params = [{transform_indices = @transform_0, window_bounds = array<i64: 8, 32>}, {pipeline_mode = #tpu.pipeline_mode<synchronous>, transform_indices = @transform_1, window_bounds = array<i64: 128, 32>}, {pipeline_mode = #tpu.pipeline_mode<synchronous>, transform_indices = @transform_2, window_bounds = array<i64: 1, 128>}, {pipeline_mode = #tpu.pipeline_mode<synchronous>, transform_indices = @transform_3, window_bounds = array<i64: 16, 128>}, {transform_indices = @transform_4, window_bounds = array<i64: 8, 1>}, {transform_indices = @transform_5, window_bounds = array<i64: 8, 128>}]} {
    %c0 = arith.constant 0 : index
    %c0_0 = arith.constant 0 : index
    %0 = vector.load %arg1[%c0, %c0_0] : memref<8x32xf32, #tpu.memory_space<vmem>>, vector<8x32xf32>
    %c0_1 = arith.constant 0 : index
    %c0_2 = arith.constant 0 : index
    %1 = vector.load %arg2[%c0_1, %c0_2] : memref<128x32xf32, #tpu.memory_space<vmem>>, vector<128x32xf32>
    %cst = arith.constant dense<0.000000e+00> : vector<8x128xf32>
    %2 = tpu.matmul %0, %1, %cst {dimension_numbers = #tpu.dot_dimension_numbers<[1], [1], [0], [0], [0, 0, 1, 0], [], []>, precision = #tpu.contract_precision<fp32>} : vector<8x32xf32>, vector<128x32xf32>, vector<8x128xf32> -> vector<8x128xf32>
    %c0_3 = arith.constant 0 : index
    %c0_4 = arith.constant 0 : index
    %3 = vector.load %arg3[%c0_3, %c0_4] : memref<1x128xf32, #tpu.memory_space<vmem>>, vector<1x128xf32>
    %4 = vector.broadcast %3 : vector<1x128xf32> to vector<8x128xf32>
    %5 = arith.addf %2, %4 : vector<8x128xf32>
    %c0_5 = arith.constant 0 : index
    %c0_6 = arith.constant 0 : index
    %6 = vector.load %arg5[%c0_5, %c0_6] : memref<8x1xi32, #tpu.memory_space<vmem>>, vector<8x1xi32>
    %7 = tpu.iota {dimensions = array<i32: 1>} : vector<8x16xi32>
    %8 = vector.broadcast %6 : vector<8x1xi32> to vector<8x16xi32>
    %9 = arith.cmpi eq, %7, %8 : vector<8x16xi32>
    %10 = arith.extui %9 : vector<8x16xi1> to vector<8x16xi32>
    %11 = arith.sitofp %10 : vector<8x16xi32> to vector<8x16xf32>
    %c0_7 = arith.constant 0 : index
    %c0_8 = arith.constant 0 : index
    %12 = vector.load %arg4[%c0_7, %c0_8] : memref<16x128xf32, #tpu.memory_space<vmem>>, vector<16x128xf32>
    %cst_9 = arith.constant dense<0.000000e+00> : vector<8x128xf32>
    %13 = tpu.matmul %11, %12, %cst_9 {dimension_numbers = #tpu.dot_dimension_numbers<[1], [0], [0], [1], [0, 0, 1, 1], [], []>, precision = #tpu.contract_precision<fp32>} : vector<8x16xf32>, vector<16x128xf32>, vector<8x128xf32> -> vector<8x128xf32>
    %14 = arith.mulf %13, %5 : vector<8x128xf32>
    %c0_10 = arith.constant 0 : index
    %c0_11 = arith.constant 0 : index
    %15 = vector.load %arg6[%c0_10, %c0_11] : memref<8x128xf32, #tpu.memory_space<vmem>>, vector<8x128xf32>
    tpu.vector_store %arg6[%c0_10, %c0_11], %14 {strides = array<i32>} : memref<8x128xf32, #tpu.memory_space<vmem>>, vector<8x128xf32>,
    return
  }
  func.func @transform_0(%arg0: i32) -> (i32, i32) {
    %c0_i32 = arith.constant 0 : i32
    %c0_i32_0 = arith.constant 0 : i32
    return %arg0, %c0_i32 : i32, i32
  }
  func.func @transform_1(%arg0: i32) -> (i32, i32) {
    %c0_i32 = arith.constant 0 : i32
    %c0_i32_0 = arith.constant 0 : i32
    %c0_i32_1 = arith.constant 0 : i32
    return %c0_i32, %c0_i32_0 : i32, i32
  }
  func.func @transform_2(%arg0: i32) -> (i32, i32) {
    %c0_i32 = arith.constant 0 : i32
    %c0_i32_0 = arith.constant 0 : i32
    %c0_i32_1 = arith.constant 0 : i32
    return %c0_i32, %c0_i32_0 : i32, i32
  }
  func.func @transform_3(%arg0: i32) -> (i32, i32) {
    %c0_i32 = arith.constant 0 : i32
    %c0_i32_0 = arith.constant 0 : i32
    %c0_i32_1 = arith.constant 0 : i32
    return %c0_i32, %c0_i32_0 : i32, i32
  }
  func.func @transform_4(%arg0: i32) -> (i32, i32) {
    %c0_i32 = arith.constant 0 : i32
    %c0_i32_0 = arith.constant 0 : i32
    return %arg0, %c0_i32 : i32, i32
  }
  func.func @transform_5(%arg0: i32) -> (i32, i32) {
    %c0_i32 = arith.constant 0 : i32
    %c0_i32_0 = arith.constant 0 : i32
    return %arg0, %c0_i32 : i32, i32
  }
}

</mosaic_0001>

<llo_original>
// kernel: tpu_custom_call.1
$region0: #{tpu_custom_call.1}
  #allocation0 [shape = 'u32[]', space=smem, size = 0x4, offset = 0x4, fixed_abs, tag = 'smem constant byte address 0x4 - core index']
  #allocation1 [shape = 'u32[144,128]{1,0:T(1,128)}', space=vmem, size = 0x12000, scoped, tag = 'internal scratch']
  %s0 = inlined_call_operand.vmem [shape: f32[8,32], index: 0, kind: input, shape index: {}]
  %s1 = inlined_call_operand.vmem [shape: f32[128,32], index: 1, kind: input, shape index: {}]
  %s2 = inlined_call_operand.vmem [shape: f32[1,128], index: 2, kind: input, shape index: {}]
  %s3 = inlined_call_operand.vmem [shape: f32[16,128], index: 3, kind: input, shape index: {}]
  %s4 = inlined_call_operand.vmem [shape: s32[8,1], index: 4, kind: input, shape index: {}]
  %s5 = inlined_call_operand.hbm [shape: f32[8,128], index: 5, kind: output, shape index: {}]
  %s6 = sld [smem:[#allocation0]]
  $region30: #{tpu_custom_call.1} parent=0
    _
  %s8 = ssub.s32 1, %s6
  %s9 = scalar_select 0, %s8, %s6
  $region1: #{tpu_custom_call.1} parent=0
    #allocation2 [shape = 'u8[4096]{0}', space=vmem, size = 0x1000, scoped, tag = 'output window, operand 0, single buffered']
    #allocation3 [shape = 's32[1]{0}', space=sflag, size = 0x4, scoped, tag = 'scoped memory for tpu_custom_call.1']
    %10 = vsyncpa [#allocation3], 0
    // Predicated region
    $region2: #{tpu_custom_call.1} parent=1 // pred_check
      _
    $region3: #{tpu_custom_call.1} parent=1 // pred_check_branch
      %12 = sbr.rel (0) target = $region5
    $region4: #{tpu_custom_call.1} parent=1 // pred_region
      _
    $region5: #{tpu_custom_call.1} parent=1 // pred_fallthru
      _
    // Predicated region
    $region6: #{tpu_custom_call.1} parent=1 // pred_check
      _
    $region7: #{tpu_custom_call.1} parent=1 // pred_check_branch
      %14 = sbr.rel (0) target = $region9
    $region8: #{tpu_custom_call.1} parent=1 // pred_region
      _
    $region9: #{tpu_custom_call.1} parent=1 // pred_fallthru
      _
    // Predicated region
    $region10: #{tpu_custom_call.1} parent=1 // pred_check
      _
    $region11: #{tpu_custom_call.1} parent=1 // pred_check_branch
      %16 = sbr.rel (0) target = $region13
    $region12: #{tpu_custom_call.1} parent=1 // pred_region
      _
    $region13: #{tpu_custom_call.1} parent=1 // pred_fallthru
      _
    // Predicated region
    $region14: #{tpu_custom_call.1} parent=1 // pred_check
      _
    $region15: #{tpu_custom_call.1} parent=1 // pred_check_branch
      %18 = sbr.rel (0) target = $region17
    $region16: #{tpu_custom_call.1} parent=1 // pred_region
      _
    $region17: #{tpu_custom_call.1} parent=1 // pred_fallthru
      _
    // Predicated region
    $region18: #{tpu_custom_call.1} parent=1 // pred_check
      _
    $region19: #{tpu_custom_call.1} parent=1 // pred_check_branch
      %20 = sbr.rel (0) target = $region21
    $region20: #{tpu_custom_call.1} parent=1 // pred_region
      _
    $region21: #{tpu_custom_call.1} parent=1 // pred_fallthru
      _
    %v21 = vld [vmem:[%s0] sm:$0xff]
    %v22 = vld [vmem:[%s1] sm:$0xff]
    %v23 = vld [vmem:[%s1 + $0x8] sm:$0xff]
    %v24 = vld [vmem:[%s1 + $0x10] sm:$0xff]
    %v25 = vld [vmem:[%s1 + $0x18] sm:$0xff]
    %v26 = vld [vmem:[%s1 + $0x20] sm:$0xff]
    %v27 = vld [vmem:[%s1 + $0x28] sm:$0xff]
    %v28 = vld [vmem:[%s1 + $0x30] sm:$0xff]
    %v29 = vld [vmem:[%s1 + $0x38] sm:$0xff]
    %v30 = vld [vmem:[%s1 + $0x40] sm:$0xff]
    %v31 = vld [vmem:[%s1 + $0x48] sm:$0xff]
    %v32 = vld [vmem:[%s1 + $0x50] sm:$0xff]
    %v33 = vld [vmem:[%s1 + $0x58] sm:$0xff]
    %v34 = vld [vmem:[%s1 + $0x60] sm:$0xff]
    %v35 = vld [vmem:[%s1 + $0x68] sm:$0xff]
    %v36 = vld [vmem:[%s1 + $0x70] sm:$0xff]
    %v37 = vld [vmem:[%s1 + $0x78] sm:$0xff]
    %v38 = vld [vmem:[%s2] sm:$0x1]
    %v40 = vlaneseq
    %v41 = vshrl.u32 %v40, 7
    %v42 = vsub.s32 0, %v41
    %v43 = vrot.slane %v38, %v42
    %vm45 = vcmask 261120
    %v47 = vsel %vm45, %v21, 0
    %v50 = vsel %vm45, %v22, 0
    %v53 = vsel %vm45, %v23, 0
    %v56 = vsel %vm45, %v24, 0
    %v59 = vsel %vm45, %v25, 0
    %v62 = vsel %vm45, %v26, 0
    %v65 = vsel %vm45, %v27, 0
    %v68 = vsel %vm45, %v28, 0
    %v71 = vsel %vm45, %v29, 0
    %v74 = vsel %vm45, %v30, 0
    %v77 = vsel %vm45, %v31, 0
    %v80 = vsel %vm45, %v32, 0
    %v83 = vsel %vm45, %v33, 0
    %v86 = vsel %vm45, %v34, 0
    %v89 = vsel %vm45, %v35, 0
    %v92 = vsel %vm45, %v36, 0
    %v95 = vsel %vm45, %v37, 0
    %97 = vmatprep.subr.mxu0 0.0
    %v98 = vand.u32 %v95, 4294901760
    %99 = vmatpush1.xpose.msra.mxu0 %v98
    %100 = vmatprep.subr.mxu0 0.0
    %v101 = vand.u32 %v92, 4294901760
    %102 = vmatpush1.xpose.msra.mxu0 %v101
    %103 = vmatprep.subr.mxu0 0.0
    %v104 = vand.u32 %v89, 4294901760
    %105 = vmatpush1.xpose.msra.mxu0 %v104
    %106 = vmatprep.subr.mxu0 0.0
    %v107 = vand.u32 %v86, 4294901760
    %108 = vmatpush1.xpose.msra.mxu0 %v107
    %109 = vmatprep.subr.mxu0 0.0
    %v110 = vand.u32 %v83, 4294901760
    %111 = vmatpush1.xpose.msra.mxu0 %v110
    %112 = vmatprep.subr.mxu0 0.0
    %v113 = vand.u32 %v80, 4294901760
    %114 = vmatpush1.xpose.msra.mxu0 %v113
    %115 = vmatprep.subr.mxu0 0.0
    %v116 = vand.u32 %v77, 4294901760
    %117 = vmatpush1.xpose.msra.mxu0 %v116
    %118 = vmatprep.subr.mxu0 0.0
    %v119 = vand.u32 %v74, 4294901760
    %120 = vmatpush1.xpose.msra.mxu0 %v119
    %121 = vmatprep.subr.mxu0 0.0
    %v122 = vand.u32 %v71, 4294901760
    %123 = vmatpush1.xpose.msra.mxu0 %v122
    %124 = vmatprep.subr.mxu0 0.0
    %v125 = vand.u32 %v68, 4294901760
    %126 = vmatpush1.xpose.msra.mxu0 %v125
    %127 = vmatprep.subr.mxu0 0.0
    %v128 = vand.u32 %v65, 4294901760
    %129 = vmatpush1.xpose.msra.mxu0 %v128
    %130 = vmatprep.subr.mxu0 0.0
    %v131 = vand.u32 %v62, 4294901760
    %132 = vmatpush1.xpose.msra.mxu0 %v131
    %133 = vmatprep.subr.mxu0 0.0
    %v134 = vand.u32 %v59, 4294901760
    %135 = vmatpush1.xpose.msra.mxu0 %v134
    %136 = vmatprep.subr.mxu0 0.0
    %v137 = vand.u32 %v56, 4294901760
    %138 = vmatpush1.xpose.msra.mxu0 %v137
    %139 = vmatprep.subr.mxu0 0.0
    %v140 = vand.u32 %v53, 4294901760
    %141 = vmatpush1.xpose.msra.mxu0 %v140
    %142 = vmatprep.subr.mxu0 0.0
    %v143 = vand.u32 %v50, 4294901760
    %144 = vmatpush1.xpose.msra.mxu0 %v143
    %145 = vmatprep.subr.mxu0 0.0
    %146 = vmatpush2.xpose.msra.mxu0 0.0
    %147 = vmatprep.subr.mxu0 0.0
    %148 = vmatpush2.xpose.msra.mxu0 0.0
    %149 = vmatprep.subr.mxu0 0.0
    %150 = vmatpush2.xpose.msra.mxu0 0.0
    %151 = vmatprep.subr.mxu0 0.0
    %152 = vmatpush2.xpose.msra.mxu0 0.0
    %153 = vmatprep.subr.mxu0 0.0
    %154 = vmatpush2.xpose.msra.mxu0 0.0
    %155 = vmatprep.subr.mxu0 0.0
    %156 = vmatpush2.xpose.msra.mxu0 0.0
    %157 = vmatprep.subr.mxu0 0.0
    %158 = vmatpush2.xpose.msra.mxu0 0.0
    %159 = vmatprep.subr.mxu0 0.0
    %160 = vmatpush2.xpose.msra.mxu0 0.0
    %161 = vmatprep.subr.mxu0 0.0
    %162 = vmatpush2.xpose.msra.mxu0 0.0
    %163 = vmatprep.subr.mxu0 0.0
    %164 = vmatpush2.xpose.msra.mxu0 0.0
    %165 = vmatprep.subr.mxu0 0.0
    %166 = vmatpush2.xpose.msra.mxu0 0.0
    %167 = vmatprep.subr.mxu0 0.0
    %168 = vmatpush2.xpose.msra.mxu0 0.0
    %169 = vmatprep.subr.mxu0 0.0
    %170 = vmatpush2.xpose.msra.mxu0 0.0
    %171 = vmatprep.subr.mxu0 0.0
    %172 = vmatpush2.xpose.msra.mxu0 0.0
    %173 = vmatprep.subr.mxu0 0.0
    %174 = vmatpush2.xpose.msra.mxu0 0.0
    %175 = vmatprep.subr.mxu0 0.0
    %176 = vmatpush2.xpose.msra.mxu0 0.0
    %177 = vmatprep.mubr.f32.mxu0 0.0
    %v178 = vand.u32 %v47, 4294901760
    %v179 = vsub.f32 %v47, %v178
    %v180 = vand.u32 %v179, 4294901760
    %v181 = vsub.f32 %v179, %v180
    %v182 = vand.u32 %v181, 4294901760
    %183 = vmatmul.mubr.f32.gmra.mxu0 %v182
    %v184 = vpop.f32.mrf.mxu0
    %v185 = vadd.f32 %v43, %v184
    %v186 = vpop.f32.mrf.mxu0
    %187 = vdwg.mxu0
    %188 = vmatprep.subr.mxu0 0.0
    %v189 = vand.u32 %v95, 4294901760
    %v190 = vsub.f32 %v95, %v189
    %v191 = vand.u32 %v190, 4294901760
    %v192 = vsub.f32 %v190, %v191
    %v193 = vand.u32 %v192, 4294901760
    %194 = vmatpush1.xpose.msra.mxu0 %v193
    %195 = vmatprep.subr.mxu0 0.0
    %v196 = vand.u32 %v92, 4294901760
    %v197 = vsub.f32 %v92, %v196
    %v198 = vand.u32 %v197, 4294901760
    %v199 = vsub.f32 %v197, %v198
    %v200 = vand.u32 %v199, 4294901760
    %201 = vmatpush1.xpose.msra.mxu0 %v200
    %202 = vmatprep.subr.mxu0 0.0
    %v203 = vand.u32 %v89, 4294901760
    %v204 = vsub.f32 %v89, %v203
    %v205 = vand.u32 %v204, 4294901760
    %v206 = vsub.f32 %v204, %v205
    %v207 = vand.u32 %v206, 4294901760
    %208 = vmatpush1.xpose.msra.mxu0 %v207
    %209 = vmatprep.subr.mxu0 0.0
    %v210 = vand.u32 %v86, 4294901760
    %v211 = vsub.f32 %v86, %v210
    %v212 = vand.u32 %v211, 4294901760
    %v213 = vsub.f32 %v211, %v212
    %v214 = vand.u32 %v213, 4294901760
    %215 = vmatpush1.xpose.msra.mxu0 %v214
    %216 = vmatprep.subr.mxu0 0.0
    %v217 = vand.u32 %v83, 4294901760
    %v218 = vsub.f32 %v83, %v217
    %v219 = vand.u32 %v218, 4294901760
    %v220 = vsub.f32 %v218, %v219
    %v221 = vand.u32 %v220, 4294901760
    %222 = vmatpush1.xpose.msra.mxu0 %v221
    %223 = vmatprep.subr.mxu0 0.0
    %v224 = vand.u32 %v80, 4294901760
    %v225 = vsub.f32 %v80, %v224
    %v226 = vand.u32 %v225, 4294901760
    %v227 = vsub.f32 %v225, %v226
    %v228 = vand.u32 %v227, 4294901760
    %229 = vmatpush1.xpose.msra.mxu0 %v228
    %230 = vmatprep.subr.mxu0 0.0
    %v231 = vand.u32 %v77, 4294901760
    %v232 = vsub.f32 %v77, %v231
    %v233 = vand.u32 %v232, 4294901760
    %v234 = vsub.f32 %v232, %v233
    %v235 = vand.u32 %v234, 4294901760
    %236 = vmatpush1.xpose.msra.mxu0 %v235
    %237 = vmatprep.subr.mxu0 0.0
    %v238 = vand.u32 %v74, 4294901760
    %v239 = vsub.f32 %v74, %v238
    %v240 = vand.u32 %v239, 4294901760
    %v241 = vsub.f32 %v239, %v240
    %v242 = vand.u32 %v241, 4294901760
    %243 = vmatpush1.xpose.msra.mxu0 %v242
    %244 = vmatprep.subr.mxu0 0.0
    %v245 = vand.u32 %v71, 4294901760
    %v246 = vsub.f32 %v71, %v245
    %v247 = vand.u32 %v246, 4294901760
    %v248 = vsub.f32 %v246, %v247
    %v249 = vand.u32 %v248, 4294901760
    %250 = vmatpush1.xpose.msra.mxu0 %v249
    %251 = vmatprep.subr.mxu0 0.0
    %v252 = vand.u32 %v68, 4294901760
    %v253 = vsub.f32 %v68, %v252
    %v254 = vand.u32 %v253, 4294901760
    %v255 = vsub.f32 %v253, %v254
    %v256 = vand.u32 %v255, 4294901760
    %257 = vmatpush1.xpose.msra.mxu0 %v256
    %258 = vmatprep.subr.mxu0 0.0
    %v259 = vand.u32 %v65, 4294901760
    %v260 = vsub.f32 %v65, %v259
    %v261 = vand.u32 %v260, 4294901760
    %v262 = vsub.f32 %v260, %v261
    %v263 = vand.u32 %v262, 4294901760
    %264 = vmatpush1.xpose.msra.mxu0 %v263
    %265 = vmatprep.subr.mxu0 0.0
    %v266 = vand.u32 %v62, 4294901760
    %v267 = vsub.f32 %v62, %v266
    %v268 = vand.u32 %v267, 4294901760
    %v269 = vsub.f32 %v267, %v268
    %v270 = vand.u32 %v269, 4294901760
    %271 = vmatpush1.xpose.msra.mxu0 %v270
    %272 = vmatprep.subr.mxu0 0.0
    %v273 = vand.u32 %v59, 4294901760
    %v274 = vsub.f32 %v59, %v273
    %v275 = vand.u32 %v274, 4294901760
    %v276 = vsub.f32 %v274, %v275
    %v277 = vand.u32 %v276, 4294901760
    %278 = vmatpush1.xpose.msra.mxu0 %v277
    %279 = vmatprep.subr.mxu0 0.0
    %v280 = vand.u32 %v56, 4294901760
    %v281 = vsub.f32 %v56, %v280
    %v282 = vand.u32 %v281, 4294901760
    %v283 = vsub.f32 %v281, %v282
    %v284 = vand.u32 %v283, 4294901760
    %285 = vmatpush1.xpose.msra.mxu0 %v284
    %286 = vmatprep.subr.mxu0 0.0
    %v287 = vand.u32 %v53, 4294901760
    %v288 = vsub.f32 %v53, %v287
    %v289 = vand.u32 %v288, 4294901760
    %v290 = vsub.f32 %v288, %v289
    %v291 = vand.u32 %v290, 4294901760
    %292 = vmatpush1.xpose.msra.mxu0 %v291
    %293 = vmatprep.subr.mxu0 0.0
    %v294 = vand.u32 %v50, 4294901760
    %v295 = vsub.f32 %v50, %v294
    %v296 = vand.u32 %v295, 4294901760
    %v297 = vsub.f32 %v295, %v296
    %v298 = vand.u32 %v297, 4294901760
    %299 = vmatpush1.xpose.msra.mxu0 %v298
    %300 = vmatprep.subr.mxu0 0.0
    %301 = vmatpush2.xpose.msra.mxu0 0.0
    %302 = vmatprep.subr.mxu0 0.0
    %303 = vmatpush2.xpose.msra.mxu0 0.0
    %304 = vmatprep.subr.mxu0 0.0
    %305 = vmatpush2.xpose.msra.mxu0 0.0
    %306 = vmatprep.subr.mxu0 0.0
    %307 = vmatpush2.xpose.msra.mxu0 0.0
    %308 = vmatprep.subr.mxu0 0.0
    %309 = vmatpush2.xpose.msra.mxu0 0.0
    %310 = vmatprep.subr.mxu0 0.0
    %311 = vmatpush2.xpose.msra.mxu0 0.0
    %312 = vmatprep.subr.mxu0 0.0
    %313 = vmatpush2.xpose.msra.mxu0 0.0
    %314 = vmatprep.subr.mxu0 0.0
    %315 = vmatpush2.xpose.msra.mxu0 0.0
    %316 = vmatprep.subr.mxu0 0.0
    %317 = vmatpush2.xpose.msra.mxu0 0.0
    %318 = vmatprep.subr.mxu0 0.0
    %319 = vmatpush2.xpose.msra.mxu0 0.0
    %320 = vmatprep.subr.mxu0 0.0
    %321 = vmatpush2.xpose.msra.mxu0 0.0
    %322 = vmatprep.subr.mxu0 0.0
    %323 = vmatpush2.xpose.msra.mxu0 0.0
    %324 = vmatprep.subr.mxu0 0.0
    %325 = vmatpush2.xpose.msra.mxu0 0.0
    %326 = vmatprep.subr.mxu0 0.0
    %327 = vmatpush2.xpose.msra.mxu0 0.0
    %328 = vmatprep.subr.mxu0 0.0
    %329 = vmatpush2.xpose.msra.mxu0 0.0
    %330 = vmatprep.subr.mxu0 0.0
    %331 = vmatpush2.xpose.msra.mxu0 0.0
    %332 = vmatprep.mubr.f32.mxu0 0.0
    %v333 = vand.u32 %v47, 4294901760
    %334 = vmatmul.mubr.f32.gmra.mxu0 %v333
    %v335 = vpop.f32.mrf.mxu0
    %v336 = vadd.f32 %v185, %v335
    %v337 = vpop.f32.mrf.mxu0
    %338 = vdwg.mxu0
    %339 = vmatprep.subr.mxu0 0.0
    %v340 = vand.u32 %v95, 4294901760
    %v341 = vsub.f32 %v95, %v340
    %342 = vmatpush1.xpose.msra.mxu0 %v341
    %343 = vmatprep.subr.mxu0 0.0
    %v344 = vand.u32 %v92, 4294901760
    %v345 = vsub.f32 %v92, %v344
    %346 = vmatpush1.xpose.msra.mxu0 %v345
    %347 = vmatprep.subr.mxu0 0.0
    %v348 = vand.u32 %v89, 4294901760
    %v349 = vsub.f32 %v89, %v348
    %350 = vmatpush1.xpose.msra.mxu0 %v349
    %351 = vmatprep.subr.mxu0 0.0
    %v352 = vand.u32 %v86, 4294901760
    %v353 = vsub.f32 %v86, %v352
    %354 = vmatpush1.xpose.msra.mxu0 %v353
    %355 = vmatprep.subr.mxu0 0.0
    %v356 = vand.u32 %v83, 4294901760
    %v357 = vsub.f32 %v83, %v356
    %358 = vmatpush1.xpose.msra.mxu0 %v357
    %359 = vmatprep.subr.mxu0 0.0
    %v360 = vand.u32 %v80, 4294901760
    %v361 = vsub.f32 %v80, %v360
    %362 = vmatpush1.xpose.msra.mxu0 %v361
    %363 = vmatprep.subr.mxu0 0.0
    %v364 = vand.u32 %v77, 4294901760
    %v365 = vsub.f32 %v77, %v364
    %366 = vmatpush1.xpose.msra.mxu0 %v365
    %367 = vmatprep.subr.mxu0 0.0
    %v368 = vand.u32 %v74, 4294901760
    %v369 = vsub.f32 %v74, %v368
    %370 = vmatpush1.xpose.msra.mxu0 %v369
    %371 = vmatprep.subr.mxu0 0.0
    %v372 = vand.u32 %v71, 4294901760
    %v373 = vsub.f32 %v71, %v372
    %374 = vmatpush1.xpose.msra.mxu0 %v373
    %375 = vmatprep.subr.mxu0 0.0
    %v376 = vand.u32 %v68, 4294901760
    %v377 = vsub.f32 %v68, %v376
    %378 = vmatpush1.xpose.msra.mxu0 %v377
    %379 = vmatprep.subr.mxu0 0.0
    %v380 = vand.u32 %v65, 4294901760
    %v381 = vsub.f32 %v65, %v380
    %382 = vmatpush1.xpose.msra.mxu0 %v381
    %383 = vmatprep.subr.mxu0 0.0
    %v384 = vand.u32 %v62, 4294901760
    %v385 = vsub.f32 %v62, %v384
    %386 = vmatpush1.xpose.msra.mxu0 %v385
    %387 = vmatprep.subr.mxu0 0.0
    %v388 = vand.u32 %v59, 4294901760
    %v389 = vsub.f32 %v59, %v388
    %390 = vmatpush1.xpose.msra.mxu0 %v389
    %391 = vmatprep.subr.mxu0 0.0
    %v392 = vand.u32 %v56, 4294901760
    %v393 = vsub.f32 %v56, %v392
    %394 = vmatpush1.xpose.msra.mxu0 %v393
    %395 = vmatprep.subr.mxu0 0.0
    %v396 = vand.u32 %v53, 4294901760
    %v397 = vsub.f32 %v53, %v396
    %398 = vmatpush1.xpose.msra.mxu0 %v397
    %399 = vmatprep.subr.mxu0 0.0
    %v400 = vand.u32 %v50, 4294901760
    %v401 = vsub.f32 %v50, %v400
    %402 = vmatpush1.xpose.msra.mxu0 %v401
    %403 = vmatprep.subr.mxu0 0.0
    %404 = vmatpush2.xpose.msra.mxu0 0.0
    %405 = vmatprep.subr.mxu0 0.0
    %406 = vmatpush2.xpose.msra.mxu0 0.0
    %407 = vmatprep.subr.mxu0 0.0
    %408 = vmatpush2.xpose.msra.mxu0 0.0
    %409 = vmatprep.subr.mxu0 0.0
    %410 = vmatpush2.xpose.msra.mxu0 0.0
    %411 = vmatprep.subr.mxu0 0.0
    %412 = vmatpush2.xpose.msra.mxu0 0.0
    %413 = vmatprep.subr.mxu0 0.0
    %414 = vmatpush2.xpose.msra.mxu0 0.0
    %415 = vmatprep.subr.mxu0 0.0
    %416 = vmatpush2.xpose.msra.mxu0 0.0
    %417 = vmatprep.subr.mxu0 0.0
    %418 = vmatpush2.xpose.msra.mxu0 0.0
    %419 = vmatprep.subr.mxu0 0.0
    %420 = vmatpush2.xpose.msra.mxu0 0.0
    %421 = vmatprep.subr.mxu0 0.0
    %422 = vmatpush2.xpose.msra.mxu0 0.0
    %423 = vmatprep.subr.mxu0 0.0
    %424 = vmatpush2.xpose.msra.mxu0 0.0
    %425 = vmatprep.subr.mxu0 0.0
    %426 = vmatpush2.xpose.msra.mxu0 0.0
    %427 = vmatprep.subr.mxu0 0.0
    %428 = vmatpush2.xpose.msra.mxu0 0.0
    %429 = vmatprep.subr.mxu0 0.0
    %430 = vmatpush2.xpose.msra.mxu0 0.0
    %431 = vmatprep.subr.mxu0 0.0
    %432 = vmatpush2.xpose.msra.mxu0 0.0
    %433 = vmatprep.subr.mxu0 0.0
    %434 = vmatpush2.xpose.msra.mxu0 0.0
    %435 = vmatprep.mubr.f32.mxu0 0.0
    %v436 = vand.u32 %v47, 4294901760
    %v437 = vsub.f32 %v47, %v436
    %438 = vmatmul.mubr.f32.gmra.mxu0 %v437
    %v439 = vpop.f32.mrf.mxu0
    %v440 = vadd.f32 %v336, %v439
    %v441 = vpop.f32.mrf.mxu0
    %442 = vdwg.mxu0
    %443 = vmatprep.subr.mxu0 0.0
    %v444 = vand.u32 %v95, 4294901760
    %445 = vmatpush1.xpose.msra.mxu0 %v444
    %446 = vmatprep.subr.mxu0 0.0
    %v447 = vand.u32 %v92, 4294901760
    %448 = vmatpush1.xpose.msra.mxu0 %v447
    %449 = vmatprep.subr.mxu0 0.0
    %v450 = vand.u32 %v89, 4294901760
    %451 = vmatpush1.xpose.msra.mxu0 %v450
    %452 = vmatprep.subr.mxu0 0.0
    %v453 = vand.u32 %v86, 4294901760
    %454 = vmatpush1.xpose.msra.mxu0 %v453
    %455 = vmatprep.subr.mxu0 0.0
    %v456 = vand.u32 %v83, 4294901760
    %457 = vmatpush1.xpose.msra.mxu0 %v456
    %458 = vmatprep.subr.mxu0 0.0
    %v459 = vand.u32 %v80, 4294901760
    %460 = vmatpush1.xpose.msra.mxu0 %v459
    %461 = vmatprep.subr.mxu0 0.0
    %v462 = vand.u32 %v77, 4294901760
    %463 = vmatpush1.xpose.msra.mxu0 %v462
    %464 = vmatprep.subr.mxu0 0.0
    %v465 = vand.u32 %v74, 4294901760
    %466 = vmatpush1.xpose.msra.mxu0 %v465
    %467 = vmatprep.subr.mxu0 0.0
    %v468 = vand.u32 %v71, 4294901760
    %469 = vmatpush1.xpose.msra.mxu0 %v468
    %470 = vmatprep.subr.mxu0 0.0
    %v471 = vand.u32 %v68, 4294901760
    %472 = vmatpush1.xpose.msra.mxu0 %v471
    %473 = vmatprep.subr.mxu0 0.0
    %v474 = vand.u32 %v65, 4294901760
    %475 = vmatpush1.xpose.msra.mxu0 %v474
    %476 = vmatprep.subr.mxu0 0.0
    %v477 = vand.u32 %v62, 4294901760
    %478 = vmatpush1.xpose.msra.mxu0 %v477
    %479 = vmatprep.subr.mxu0 0.0
    %v480 = vand.u32 %v59, 4294901760
    %481 = vmatpush1.xpose.msra.mxu0 %v480
    %482 = vmatprep.subr.mxu0 0.0
    %v483 = vand.u32 %v56, 4294901760
    %484 = vmatpush1.xpose.msra.mxu0 %v483
    %485 = vmatprep.subr.mxu0 0.0
    %v486 = vand.u32 %v53, 4294901760
    %487 = vmatpush1.xpose.msra.mxu0 %v486
    %488 = vmatprep.subr.mxu0 0.0
    %v489 = vand.u32 %v50, 4294901760
    %490 = vmatpush1.xpose.msra.mxu0 %v489
    %491 = vmatprep.subr.mxu0 0.0
    %492 = vmatpush2.xpose.msra.mxu0 0.0
    %493 = vmatprep.subr.mxu0 0.0
    %494 = vmatpush2.xpose.msra.mxu0 0.0
    %495 = vmatprep.subr.mxu0 0.0
    %496 = vmatpush2.xpose.msra.mxu0 0.0
    %497 = vmatprep.subr.mxu0 0.0
    %498 = vmatpush2.xpose.msra.mxu0 0.0
    %499 = vmatprep.subr.mxu0 0.0
    %500 = vmatpush2.xpose.msra.mxu0 0.0
    %501 = vmatprep.subr.mxu0 0.0
    %502 = vmatpush2.xpose.msra.mxu0 0.0
    %503 = vmatprep.subr.mxu0 0.0
    %504 = vmatpush2.xpose.msra.mxu0 0.0
    %505 = vmatprep.subr.mxu0 0.0
    %506 = vmatpush2.xpose.msra.mxu0 0.0
    %507 = vmatprep.subr.mxu0 0.0
    %508 = vmatpush2.xpose.msra.mxu0 0.0
    %509 = vmatprep.subr.mxu0 0.0
    %510 = vmatpush2.xpose.msra.mxu0 0.0
    %511 = vmatprep.subr.mxu0 0.0
    %512 = vmatpush2.xpose.msra.mxu0 0.0
    %513 = vmatprep.subr.mxu0 0.0
    %514 = vmatpush2.xpose.msra.mxu0 0.0
    %515 = vmatprep.subr.mxu0 0.0
    %516 = vmatpush2.xpose.msra.mxu0 0.0
    %517 = vmatprep.subr.mxu0 0.0
    %518 = vmatpush2.xpose.msra.mxu0 0.0
    %519 = vmatprep.subr.mxu0 0.0
    %520 = vmatpush2.xpose.msra.mxu0 0.0
    %521 = vmatprep.subr.mxu0 0.0
    %522 = vmatpush2.xpose.msra.mxu0 0.0
    %523 = vmatprep.mubr.f32.mxu0 0.0
    %v524 = vand.u32 %v47, 4294901760
    %v525 = vsub.f32 %v47, %v524
    %v526 = vand.u32 %v525, 4294901760
    %527 = vmatmul.mubr.f32.gmra.mxu0 %v526
    %v528 = vpop.f32.mrf.mxu0
    %v529 = vadd.f32 %v440, %v528
    %v530 = vpop.f32.mrf.mxu0
    %531 = vdwg.mxu0
    %532 = vmatprep.subr.mxu0 0.0
    %v533 = vand.u32 %v95, 4294901760
    %v534 = vsub.f32 %v95, %v533
    %v535 = vand.u32 %v534, 4294901760
    %536 = vmatpush1.xpose.msra.mxu0 %v535
    %537 = vmatprep.subr.mxu0 0.0
    %v538 = vand.u32 %v92, 4294901760
    %v539 = vsub.f32 %v92, %v538
    %v540 = vand.u32 %v539, 4294901760
    %541 = vmatpush1.xpose.msra.mxu0 %v540
    %542 = vmatprep.subr.mxu0 0.0
    %v543 = vand.u32 %v89, 4294901760
    %v544 = vsub.f32 %v89, %v543
    %v545 = vand.u32 %v544, 4294901760
    %546 = vmatpush1.xpose.msra.mxu0 %v545
    %547 = vmatprep.subr.mxu0 0.0
    %v548 = vand.u32 %v86, 4294901760
    %v549 = vsub.f32 %v86, %v548
    %v550 = vand.u32 %v549, 4294901760
    %551 = vmatpush1.xpose.msra.mxu0 %v550
    %552 = vmatprep.subr.mxu0 0.0
    %v553 = vand.u32 %v83, 4294901760
    %v554 = vsub.f32 %v83, %v553
    %v555 = vand.u32 %v554, 4294901760
    %556 = vmatpush1.xpose.msra.mxu0 %v555
    %557 = vmatprep.subr.mxu0 0.0
    %v558 = vand.u32 %v80, 4294901760
    %v559 = vsub.f32 %v80, %v558
    %v560 = vand.u32 %v559, 4294901760
    %561 = vmatpush1.xpose.msra.mxu0 %v560
    %562 = vmatprep.subr.mxu0 0.0
    %v563 = vand.u32 %v77, 4294901760
    %v564 = vsub.f32 %v77, %v563
    %v565 = vand.u32 %v564, 4294901760
    %566 = vmatpush1.xpose.msra.mxu0 %v565
    %567 = vmatprep.subr.mxu0 0.0
    %v568 = vand.u32 %v74, 4294901760
    %v569 = vsub.f32 %v74, %v568
    %v570 = vand.u32 %v569, 4294901760
    %571 = vmatpush1.xpose.msra.mxu0 %v570
    %572 = vmatprep.subr.mxu0 0.0
    %v573 = vand.u32 %v71, 4294901760
    %v574 = vsub.f32 %v71, %v573
    %v575 = vand.u32 %v574, 4294901760
    %576 = vmatpush1.xpose.msra.mxu0 %v575
    %577 = vmatprep.subr.mxu0 0.0
    %v578 = vand.u32 %v68, 4294901760
    %v579 = vsub.f32 %v68, %v578
    %v580 = vand.u32 %v579, 4294901760
    %581 = vmatpush1.xpose.msra.mxu0 %v580
    %582 = vmatprep.subr.mxu0 0.0
    %v583 = vand.u32 %v65, 4294901760
    %v584 = vsub.f32 %v65, %v583
    %v585 = vand.u32 %v584, 4294901760
    %586 = vmatpush1.xpose.msra.mxu0 %v585
    %587 = vmatprep.subr.mxu0 0.0
    %v588 = vand.u32 %v62, 4294901760
    %v589 = vsub.f32 %v62, %v588
    %v590 = vand.u32 %v589, 4294901760
    %591 = vmatpush1.xpose.msra.mxu0 %v590
    %592 = vmatprep.subr.mxu0 0.0
    %v593 = vand.u32 %v59, 4294901760
    %v594 = vsub.f32 %v59, %v593
    %v595 = vand.u32 %v594, 4294901760
    %596 = vmatpush1.xpose.msra.mxu0 %v595
    %597 = vmatprep.subr.mxu0 0.0
    %v598 = vand.u32 %v56, 4294901760
    %v599 = vsub.f32 %v56, %v598
    %v600 = vand.u32 %v599, 4294901760
    %601 = vmatpush1.xpose.msra.mxu0 %v600
    %602 = vmatprep.subr.mxu0 0.0
    %v603 = vand.u32 %v53, 4294901760
    %v604 = vsub.f32 %v53, %v603
    %v605 = vand.u32 %v604, 4294901760
    %606 = vmatpush1.xpose.msra.mxu0 %v605
    %607 = vmatprep.subr.mxu0 0.0
    %v608 = vand.u32 %v50, 4294901760
    %v609 = vsub.f32 %v50, %v608
    %v610 = vand.u32 %v609, 4294901760
    %611 = vmatpush1.xpose.msra.mxu0 %v610
    %612 = vmatprep.subr.mxu0 0.0
    %613 = vmatpush2.xpose.msra.mxu0 0.0
    %614 = vmatprep.subr.mxu0 0.0
    %615 = vmatpush2.xpose.msra.mxu0 0.0
    %616 = vmatprep.subr.mxu0 0.0
    %617 = vmatpush2.xpose.msra.mxu0 0.0
    %618 = vmatprep.subr.mxu0 0.0
    %619 = vmatpush2.xpose.msra.mxu0 0.0
    %620 = vmatprep.subr.mxu0 0.0
    %621 = vmatpush2.xpose.msra.mxu0 0.0
    %622 = vmatprep.subr.mxu0 0.0
    %623 = vmatpush2.xpose.msra.mxu0 0.0
    %624 = vmatprep.subr.mxu0 0.0
    %625 = vmatpush2.xpose.msra.mxu0 0.0
    %626 = vmatprep.subr.mxu0 0.0
    %627 = vmatpush2.xpose.msra.mxu0 0.0
    %628 = vmatprep.subr.mxu0 0.0
    %629 = vmatpush2.xpose.msra.mxu0 0.0
    %630 = vmatprep.subr.mxu0 0.0
    %631 = vmatpush2.xpose.msra.mxu0 0.0
    %632 = vmatprep.subr.mxu0 0.0
    %633 = vmatpush2.xpose.msra.mxu0 0.0
    %634 = vmatprep.subr.mxu0 0.0
    %635 = vmatpush2.xpose.msra.mxu0 0.0
    %636 = vmatprep.subr.mxu0 0.0
    %637 = vmatpush2.xpose.msra.mxu0 0.0
    %638 = vmatprep.subr.mxu0 0.0
    %639 = vmatpush2.xpose.msra.mxu0 0.0
    %640 = vmatprep.subr.mxu0 0.0
    %641 = vmatpush2.xpose.msra.mxu0 0.0
    %642 = vmatprep.subr.mxu0 0.0
    %643 = vmatpush2.xpose.msra.mxu0 0.0
    %644 = vmatprep.mubr.f32.mxu0 0.0
    %v645 = vand.u32 %v47, 4294901760
    %646 = vmatmul.mubr.f32.gmra.mxu0 %v645
    %v647 = vpop.f32.mrf.mxu0
    %v648 = vadd.f32 %v529, %v647
    %v649 = vpop.f32.mrf.mxu0
    %650 = vdwg.mxu0
    %651 = vmatprep.subr.mxu0 0.0
    %v652 = vand.u32 %v95, 4294901760
    %653 = vmatpush1.xpose.msra.mxu0 %v652
    %654 = vmatprep.subr.mxu0 0.0
    %v655 = vand.u32 %v92, 4294901760
    %656 = vmatpush1.xpose.msra.mxu0 %v655
    %657 = vmatprep.subr.mxu0 0.0
    %v658 = vand.u32 %v89, 4294901760
    %659 = vmatpush1.xpose.msra.mxu0 %v658
    %660 = vmatprep.subr.mxu0 0.0
    %v661 = vand.u32 %v86, 4294901760
    %662 = vmatpush1.xpose.msra.mxu0 %v661
    %663 = vmatprep.subr.mxu0 0.0
    %v664 = vand.u32 %v83, 4294901760
    %665 = vmatpush1.xpose.msra.mxu0 %v664
    %666 = vmatprep.subr.mxu0 0.0
    %v667 = vand.u32 %v80, 4294901760
    %668 = vmatpush1.xpose.msra.mxu0 %v667
    %669 = vmatprep.subr.mxu0 0.0
    %v670 = vand.u32 %v77, 4294901760
    %671 = vmatpush1.xpose.msra.mxu0 %v670
    %672 = vmatprep.subr.mxu0 0.0
    %v673 = vand.u32 %v74, 4294901760
    %674 = vmatpush1.xpose.msra.mxu0 %v673
    %675 = vmatprep.subr.mxu0 0.0
    %v676 = vand.u32 %v71, 4294901760
    %677 = vmatpush1.xpose.msra.mxu0 %v676
    %678 = vmatprep.subr.mxu0 0.0
    %v679 = vand.u32 %v68, 4294901760
    %680 = vmatpush1.xpose.msra.mxu0 %v679
    %681 = vmatprep.subr.mxu0 0.0
    %v682 = vand.u32 %v65, 4294901760
    %683 = vmatpush1.xpose.msra.mxu0 %v682
    %684 = vmatprep.subr.mxu0 0.0
    %v685 = vand.u32 %v62, 4294901760
    %686 = vmatpush1.xpose.msra.mxu0 %v685
    %687 = vmatprep.subr.mxu0 0.0
    %v688 = vand.u32 %v59, 4294901760
    %689 = vmatpush1.xpose.msra.mxu0 %v688
    %690 = vmatprep.subr.mxu0 0.0
    %v691 = vand.u32 %v56, 4294901760
    %692 = vmatpush1.xpose.msra.mxu0 %v691
    %693 = vmatprep.subr.mxu0 0.0
    %v694 = vand.u32 %v53, 4294901760
    %695 = vmatpush1.xpose.msra.mxu0 %v694
    %696 = vmatprep.subr.mxu0 0.0
    %v697 = vand.u32 %v50, 4294901760
    %698 = vmatpush1.xpose.msra.mxu0 %v697
    %699 = vmatprep.subr.mxu0 0.0
    %700 = vmatpush2.xpose.msra.mxu0 0.0
    %701 = vmatprep.subr.mxu0 0.0
    %702 = vmatpush2.xpose.msra.mxu0 0.0
    %703 = vmatprep.subr.mxu0 0.0
    %704 = vmatpush2.xpose.msra.mxu0 0.0
    %705 = vmatprep.subr.mxu0 0.0
    %706 = vmatpush2.xpose.msra.mxu0 0.0
    %707 = vmatprep.subr.mxu0 0.0
    %708 = vmatpush2.xpose.msra.mxu0 0.0
    %709 = vmatprep.subr.mxu0 0.0
    %710 = vmatpush2.xpose.msra.mxu0 0.0
    %711 = vmatprep.subr.mxu0 0.0
    %712 = vmatpush2.xpose.msra.mxu0 0.0
    %713 = vmatprep.subr.mxu0 0.0
    %714 = vmatpush2.xpose.msra.mxu0 0.0
    %715 = vmatprep.subr.mxu0 0.0
    %716 = vmatpush2.xpose.msra.mxu0 0.0
    %717 = vmatprep.subr.mxu0 0.0
    %718 = vmatpush2.xpose.msra.mxu0 0.0
    %719 = vmatprep.subr.mxu0 0.0
    %720 = vmatpush2.xpose.msra.mxu0 0.0
    %721 = vmatprep.subr.mxu0 0.0
    %722 = vmatpush2.xpose.msra.mxu0 0.0
    %723 = vmatprep.subr.mxu0 0.0
    %724 = vmatpush2.xpose.msra.mxu0 0.0
    %725 = vmatprep.subr.mxu0 0.0
    %726 = vmatpush2.xpose.msra.mxu0 0.0
    %727 = vmatprep.subr.mxu0 0.0
    %728 = vmatpush2.xpose.msra.mxu0 0.0
    %729 = vmatprep.subr.mxu0 0.0
    %730 = vmatpush2.xpose.msra.mxu0 0.0
    %731 = vmatprep.mubr.f32.mxu0 0.0
    %v732 = vand.u32 %v47, 4294901760
    %733 = vmatmul.mubr.f32.gmra.mxu0 %v732
    %v734 = vpop.f32.mrf.mxu0
    %v735 = vadd.f32 %v648, %v734
    %v736 = vpop.f32.mrf.mxu0
    %737 = vdwg.mxu0
    %v738 = vld [vmem:[%s4] sm:$0xff]
    %v739 = vlaneseq
    %v740 = vand.u32 %v739, 127
    %741 = vset.pattern.permute.xlu0 0
    %742 = vperm.xlu0 %741, %v738
    %v743 = vpop.permute.xlu0 %742
    %vm744 = vcmp.eq.s32.totalorder %v740, %v743
    %v745 = vsel %vm744, 1, 0
    %v746 = vcvt.s32.f32 %v745
    %v747 = vld [vmem:[%s3] sm:$0xff]
    %v748 = vld [vmem:[%s3 + $0x8] sm:$0xff]
    %vm749 = vcmask 130048
    %v751 = vsel %vm749, %v746, 0
    %753 = vmatprep.subr.mxu0 0.0
    %754 = vmatpush1.msra.mxu0 0.0
    %755 = vmatprep.subr.mxu0 0.0
    %756 = vmatpush1.msra.mxu0 0.0
    %757 = vmatprep.subr.mxu0 0.0
    %758 = vmatpush1.msra.mxu0 0.0
    %759 = vmatprep.subr.mxu0 0.0
    %760 = vmatpush1.msra.mxu0 0.0
    %761 = vmatprep.subr.mxu0 0.0
    %762 = vmatpush1.msra.mxu0 0.0
    %763 = vmatprep.subr.mxu0 0.0
    %764 = vmatpush1.msra.mxu0 0.0
    %765 = vmatprep.subr.mxu0 0.0
    %766 = vmatpush1.msra.mxu0 0.0
    %767 = vmatprep.subr.mxu0 0.0
    %768 = vmatpush1.msra.mxu0 0.0
    %769 = vmatprep.subr.mxu0 0.0
    %770 = vmatpush1.msra.mxu0 0.0
    %771 = vmatprep.subr.mxu0 0.0
    %772 = vmatpush1.msra.mxu0 0.0
    %773 = vmatprep.subr.mxu0 0.0
    %774 = vmatpush1.msra.mxu0 0.0
    %775 = vmatprep.subr.mxu0 0.0
    %776 = vmatpush1.msra.mxu0 0.0
    %777 = vmatprep.subr.mxu0 0.0
    %778 = vmatpush1.msra.mxu0 0.0
    %779 = vmatprep.subr.mxu0 0.0
    %780 = vmatpush1.msra.mxu0 0.0
    %781 = vmatprep.subr.mxu0 0.0
    %v782 = vand.u32 %v748, 4294901760
    %783 = vmatpush1.msra.mxu0 %v782
    %784 = vmatprep.subr.mxu0 0.0
    %v785 = vand.u32 %v747, 4294901760
    %786 = vmatpush1.msra.mxu0 %v785
    %787 = vmatprep.subr.mxu0 0.0
    %788 = vmatpush2.msra.mxu0 0.0
    %789 = vmatprep.subr.mxu0 0.0
    %790 = vmatpush2.msra.mxu0 0.0
    %791 = vmatprep.subr.mxu0 0.0
    %792 = vmatpush2.msra.mxu0 0.0
    %793 = vmatprep.subr.mxu0 0.0
    %794 = vmatpush2.msra.mxu0 0.0
    %795 = vmatprep.subr.mxu0 0.0
    %796 = vmatpush2.msra.mxu0 0.0
    %797 = vmatprep.subr.mxu0 0.0
    %798 = vmatpush2.msra.mxu0 0.0
    %799 = vmatprep.subr.mxu0 0.0
    %800 = vmatpush2.msra.mxu0 0.0
    %801 = vmatprep.subr.mxu0 0.0
    %802 = vmatpush2.msra.mxu0 0.0
    %803 = vmatprep.subr.mxu0 0.0
    %804 = vmatpush2.msra.mxu0 0.0
    %805 = vmatprep.subr.mxu0 0.0
    %806 = vmatpush2.msra.mxu0 0.0
    %807 = vmatprep.subr.mxu0 0.0
    %808 = vmatpush2.msra.mxu0 0.0
    %809 = vmatprep.subr.mxu0 0.0
    %810 = vmatpush2.msra.mxu0 0.0
    %811 = vmatprep.subr.mxu0 0.0
    %812 = vmatpush2.msra.mxu0 0.0
    %813 = vmatprep.subr.mxu0 0.0
    %814 = vmatpush2.msra.mxu0 0.0
    %815 = vmatprep.subr.mxu0 0.0
    %816 = vmatpush2.msra.mxu0 0.0
    %817 = vmatprep.subr.mxu0 0.0
    %818 = vmatpush2.msra.mxu0 0.0
    %819 = vmatprep.mubr.f32.mxu0 0.0
    %v820 = vand.u32 %v751, 4294901760
    %v821 = vsub.f32 %v751, %v820
    %v822 = vand.u32 %v821, 4294901760
    %v823 = vsub.f32 %v821, %v822
    %v824 = vand.u32 %v823, 4294901760
    %825 = vmatmul.mubr.f32.gmra.mxu0 %v824
    %v826 = vpop.f32.mrf.mxu0
    %v827 = vadd.f32 0.0, %v826
    %v828 = vpop.f32.mrf.mxu0
    %829 = vdwg.mxu0
    %830 = vmatprep.subr.mxu0 0.0
    %831 = vmatpush1.msra.mxu0 0.0
    %832 = vmatprep.subr.mxu0 0.0
    %833 = vmatpush1.msra.mxu0 0.0
    %834 = vmatprep.subr.mxu0 0.0
    %835 = vmatpush1.msra.mxu0 0.0
    %836 = vmatprep.subr.mxu0 0.0
    %837 = vmatpush1.msra.mxu0 0.0
    %838 = vmatprep.subr.mxu0 0.0
    %839 = vmatpush1.msra.mxu0 0.0
    %840 = vmatprep.subr.mxu0 0.0
    %841 = vmatpush1.msra.mxu0 0.0
    %842 = vmatprep.subr.mxu0 0.0
    %843 = vmatpush1.msra.mxu0 0.0
    %844 = vmatprep.subr.mxu0 0.0
    %845 = vmatpush1.msra.mxu0 0.0
    %846 = vmatprep.subr.mxu0 0.0
    %847 = vmatpush1.msra.mxu0 0.0
    %848 = vmatprep.subr.mxu0 0.0
    %849 = vmatpush1.msra.mxu0 0.0
    %850 = vmatprep.subr.mxu0 0.0
    %851 = vmatpush1.msra.mxu0 0.0
    %852 = vmatprep.subr.mxu0 0.0
    %853 = vmatpush1.msra.mxu0 0.0
    %854 = vmatprep.subr.mxu0 0.0
    %855 = vmatpush1.msra.mxu0 0.0
    %856 = vmatprep.subr.mxu0 0.0
    %857 = vmatpush1.msra.mxu0 0.0
    %858 = vmatprep.subr.mxu0 0.0
    %v859 = vand.u32 %v748, 4294901760
    %v860 = vsub.f32 %v748, %v859
    %v861 = vand.u32 %v860, 4294901760
    %v862 = vsub.f32 %v860, %v861
    %v863 = vand.u32 %v862, 4294901760
    %864 = vmatpush1.msra.mxu0 %v863
    %865 = vmatprep.subr.mxu0 0.0
    %v866 = vand.u32 %v747, 4294901760
    %v867 = vsub.f32 %v747, %v866
    %v868 = vand.u32 %v867, 4294901760
    %v869 = vsub.f32 %v867, %v868
    %v870 = vand.u32 %v869, 4294901760
    %871 = vmatpush1.msra.mxu0 %v870
    %872 = vmatprep.subr.mxu0 0.0
    %873 = vmatpush2.msra.mxu0 0.0
    %874 = vmatprep.subr.mxu0 0.0
    %875 = vmatpush2.msra.mxu0 0.0
    %876 = vmatprep.subr.mxu0 0.0
    %877 = vmatpush2.msra.mxu0 0.0
    %878 = vmatprep.subr.mxu0 0.0
    %879 = vmatpush2.msra.mxu0 0.0
    %880 = vmatprep.subr.mxu0 0.0
    %881 = vmatpush2.msra.mxu0 0.0
    %882 = vmatprep.subr.mxu0 0.0
    %883 = vmatpush2.msra.mxu0 0.0
    %884 = vmatprep.subr.mxu0 0.0
    %885 = vmatpush2.msra.mxu0 0.0
    %886 = vmatprep.subr.mxu0 0.0
    %887 = vmatpush2.msra.mxu0 0.0
    %888 = vmatprep.subr.mxu0 0.0
    %889 = vmatpush2.msra.mxu0 0.0
    %890 = vmatprep.subr.mxu0 0.0
    %891 = vmatpush2.msra.mxu0 0.0
    %892 = vmatprep.subr.mxu0 0.0
    %893 = vmatpush2.msra.mxu0 0.0
    %894 = vmatprep.subr.mxu0 0.0
    %895 = vmatpush2.msra.mxu0 0.0
    %896 = vmatprep.subr.mxu0 0.0
    %897 = vmatpush2.msra.mxu0 0.0
    %898 = vmatprep.subr.mxu0 0.0
    %899 = vmatpush2.msra.mxu0 0.0
    %900 = vmatprep.subr.mxu0 0.0
    %901 = vmatpush2.msra.mxu0 0.0
    %902 = vmatprep.subr.mxu0 0.0
    %903 = vmatpush2.msra.mxu0 0.0
    %904 = vmatprep.mubr.f32.mxu0 0.0
    %v905 = vand.u32 %v751, 4294901760
    %906 = vmatmul.mubr.f32.gmra.mxu0 %v905
    %v907 = vpop.f32.mrf.mxu0
    %v908 = vadd.f32 %v827, %v907
    %v909 = vpop.f32.mrf.mxu0
    %910 = vdwg.mxu0
    %911 = vmatprep.subr.mxu0 0.0
    %912 = vmatpush1.msra.mxu0 0.0
    %913 = vmatprep.subr.mxu0 0.0
    %914 = vmatpush1.msra.mxu0 0.0
    %915 = vmatprep.subr.mxu0 0.0
    %916 = vmatpush1.msra.mxu0 0.0
    %917 = vmatprep.subr.mxu0 0.0
    %918 = vmatpush1.msra.mxu0 0.0
    %919 = vmatprep.subr.mxu0 0.0
    %920 = vmatpush1.msra.mxu0 0.0
    %921 = vmatprep.subr.mxu0 0.0
    %922 = vmatpush1.msra.mxu0 0.0
    %923 = vmatprep.subr.mxu0 0.0
    %924 = vmatpush1.msra.mxu0 0.0
    %925 = vmatprep.subr.mxu0 0.0
    %926 = vmatpush1.msra.mxu0 0.0
    %927 = vmatprep.subr.mxu0 0.0
    %928 = vmatpush1.msra.mxu0 0.0
    %929 = vmatprep.subr.mxu0 0.0
    %930 = vmatpush1.msra.mxu0 0.0
    %931 = vmatprep.subr.mxu0 0.0
    %932 = vmatpush1.msra.mxu0 0.0
    %933 = vmatprep.subr.mxu0 0.0
    %934 = vmatpush1.msra.mxu0 0.0
    %935 = vmatprep.subr.mxu0 0.0
    %936 = vmatpush1.msra.mxu0 0.0
    %937 = vmatprep.subr.mxu0 0.0
    %938 = vmatpush1.msra.mxu0 0.0
    %939 = vmatprep.subr.mxu0 0.0
    %v940 = vand.u32 %v748, 4294901760
    %v941 = vsub.f32 %v748, %v940
    %942 = vmatpush1.msra.mxu0 %v941
    %943 = vmatprep.subr.mxu0 0.0
    %v944 = vand.u32 %v747, 4294901760
    %v945 = vsub.f32 %v747, %v944
    %946 = vmatpush1.msra.mxu0 %v945
    %947 = vmatprep.subr.mxu0 0.0
    %948 = vmatpush2.msra.mxu0 0.0
    %949 = vmatprep.subr.mxu0 0.0
    %950 = vmatpush2.msra.mxu0 0.0
    %951 = vmatprep.subr.mxu0 0.0
    %952 = vmatpush2.msra.mxu0 0.0
    %953 = vmatprep.subr.mxu0 0.0
    %954 = vmatpush2.msra.mxu0 0.0
    %955 = vmatprep.subr.mxu0 0.0
    %956 = vmatpush2.msra.mxu0 0.0
    %957 = vmatprep.subr.mxu0 0.0
    %958 = vmatpush2.msra.mxu0 0.0
    %959 = vmatprep.subr.mxu0 0.0
    %960 = vmatpush2.msra.mxu0 0.0
    %961 = vmatprep.subr.mxu0 0.0
    %962 = vmatpush2.msra.mxu0 0.0
    %963 = vmatprep.subr.mxu0 0.0
    %964 = vmatpush2.msra.mxu0 0.0
    %965 = vmatprep.subr.mxu0 0.0
    %966 = vmatpush2.msra.mxu0 0.0
    %967 = vmatprep.subr.mxu0 0.0
    %968 = vmatpush2.msra.mxu0 0.0
    %969 = vmatprep.subr.mxu0 0.0
    %970 = vmatpush2.msra.mxu0 0.0
    %971 = vmatprep.subr.mxu0 0.0
    %972 = vmatpush2.msra.mxu0 0.0
    %973 = vmatprep.subr.mxu0 0.0
    %974 = vmatpush2.msra.mxu0 0.0
    %975 = vmatprep.subr.mxu0 0.0
    %976 = vmatpush2.msra.mxu0 0.0
    %977 = vmatprep.subr.mxu0 0.0
    %978 = vmatpush2.msra.mxu0 0.0
    %979 = vmatprep.mubr.f32.mxu0 0.0
    %v980 = vand.u32 %v751, 4294901760
    %v981 = vsub.f32 %v751, %v980
    %982 = vmatmul.mubr.f32.gmra.mxu0 %v981
    %v983 = vpop.f32.mrf.mxu0
    %v984 = vadd.f32 %v908, %v983
    %v985 = vpop.f32.mrf.mxu0
    %986 = vdwg.mxu0
    %987 = vmatprep.subr.mxu0 0.0
    %988 = vmatpush1.msra.mxu0 0.0
    %989 = vmatprep.subr.mxu0 0.0
    %990 = vmatpush1.msra.mxu0 0.0
    %991 = vmatprep.subr.mxu0 0.0
    %992 = vmatpush1.msra.mxu0 0.0
    %993 = vmatprep.subr.mxu0 0.0
    %994 = vmatpush1.msra.mxu0 0.0
    %995 = vmatprep.subr.mxu0 0.0
    %996 = vmatpush1.msra.mxu0 0.0
    %997 = vmatprep.subr.mxu0 0.0
    %998 = vmatpush1.msra.mxu0 0.0
    %999 = vmatprep.subr.mxu0 0.0
    %1000 = vmatpush1.msra.mxu0 0.0
    %1001 = vmatprep.subr.mxu0 0.0
    %1002 = vmatpush1.msra.mxu0 0.0
    %1003 = vmatprep.subr.mxu0 0.0
    %1004 = vmatpush1.msra.mxu0 0.0
    %1005 = vmatprep.subr.mxu0 0.0
    %1006 = vmatpush1.msra.mxu0 0.0
    %1007 = vmatprep.subr.mxu0 0.0
    %1008 = vmatpush1.msra.mxu0 0.0
    %1009 = vmatprep.subr.mxu0 0.0
    %1010 = vmatpush1.msra.mxu0 0.0
    %1011 = vmatprep.subr.mxu0 0.0
    %1012 = vmatpush1.msra.mxu0 0.0
    %1013 = vmatprep.subr.mxu0 0.0
    %1014 = vmatpush1.msra.mxu0 0.0
    %1015 = vmatprep.subr.mxu0 0.0
    %v1016 = vand.u32 %v748, 4294901760
    %1017 = vmatpush1.msra.mxu0 %v1016
    %1018 = vmatprep.subr.mxu0 0.0
    %v1019 = vand.u32 %v747, 4294901760
    %1020 = vmatpush1.msra.mxu0 %v1019
    %1021 = vmatprep.subr.mxu0 0.0
    %1022 = vmatpush2.msra.mxu0 0.0
    %1023 = vmatprep.subr.mxu0 0.0
    %1024 = vmatpush2.msra.mxu0 0.0
    %1025 = vmatprep.subr.mxu0 0.0
    %1026 = vmatpush2.msra.mxu0 0.0
    %1027 = vmatprep.subr.mxu0 0.0
    %1028 = vmatpush2.msra.mxu0 0.0
    %1029 = vmatprep.subr.mxu0 0.0
    %1030 = vmatpush2.msra.mxu0 0.0
    %1031 = vmatprep.subr.mxu0 0.0
    %1032 = vmatpush2.msra.mxu0 0.0
    %1033 = vmatprep.subr.mxu0 0.0
    %1034 = vmatpush2.msra.mxu0 0.0
    %1035 = vmatprep.subr.mxu0 0.0
    %1036 = vmatpush2.msra.mxu0 0.0
    %1037 = vmatprep.subr.mxu0 0.0
    %1038 = vmatpush2.msra.mxu0 0.0
    %1039 = vmatprep.subr.mxu0 0.0
    %1040 = vmatpush2.msra.mxu0 0.0
    %1041 = vmatprep.subr.mxu0 0.0
    %1042 = vmatpush2.msra.mxu0 0.0
    %1043 = vmatprep.subr.mxu0 0.0
    %1044 = vmatpush2.msra.mxu0 0.0
    %1045 = vmatprep.subr.mxu0 0.0
    %1046 = vmatpush2.msra.mxu0 0.0
    %1047 = vmatprep.subr.mxu0 0.0
    %1048 = vmatpush2.msra.mxu0 0.0
    %1049 = vmatprep.subr.mxu0 0.0
    %1050 = vmatpush2.msra.mxu0 0.0
    %1051 = vmatprep.subr.mxu0 0.0
    %1052 = vmatpush2.msra.mxu0 0.0
    %1053 = vmatprep.mubr.f32.mxu0 0.0
    %v1054 = vand.u32 %v751, 4294901760
    %v1055 = vsub.f32 %v751, %v1054
    %v1056 = vand.u32 %v1055, 4294901760
    %1057 = vmatmul.mubr.f32.gmra.mxu0 %v1056
    %v1058 = vpop.f32.mrf.mxu0
    %v1059 = vadd.f32 %v984, %v1058
    %v1060 = vpop.f32.mrf.mxu0
    %1061 = vdwg.mxu0
    %1062 = vmatprep.subr.mxu0 0.0
    %1063 = vmatpush1.msra.mxu0 0.0
    %1064 = vmatprep.subr.mxu0 0.0
    %1065 = vmatpush1.msra.mxu0 0.0
    %1066 = vmatprep.subr.mxu0 0.0
    %1067 = vmatpush1.msra.mxu0 0.0
    %1068 = vmatprep.subr.mxu0 0.0
    %1069 = vmatpush1.msra.mxu0 0.0
    %1070 = vmatprep.subr.mxu0 0.0
    %1071 = vmatpush1.msra.mxu0 0.0
    %1072 = vmatprep.subr.mxu0 0.0
    %1073 = vmatpush1.msra.mxu0 0.0
    %1074 = vmatprep.subr.mxu0 0.0
    %1075 = vmatpush1.msra.mxu0 0.0
    %1076 = vmatprep.subr.mxu0 0.0
    %1077 = vmatpush1.msra.mxu0 0.0
    %1078 = vmatprep.subr.mxu0 0.0
    %1079 = vmatpush1.msra.mxu0 0.0
    %1080 = vmatprep.subr.mxu0 0.0
    %1081 = vmatpush1.msra.mxu0 0.0
    %1082 = vmatprep.subr.mxu0 0.0
    %1083 = vmatpush1.msra.mxu0 0.0
    %1084 = vmatprep.subr.mxu0 0.0
    %1085 = vmatpush1.msra.mxu0 0.0
    %1086 = vmatprep.subr.mxu0 0.0
    %1087 = vmatpush1.msra.mxu0 0.0
    %1088 = vmatprep.subr.mxu0 0.0
    %1089 = vmatpush1.msra.mxu0 0.0
    %1090 = vmatprep.subr.mxu0 0.0
    %v1091 = vand.u32 %v748, 4294901760
    %v1092 = vsub.f32 %v748, %v1091
    %v1093 = vand.u32 %v1092, 4294901760
    %1094 = vmatpush1.msra.mxu0 %v1093
    %1095 = vmatprep.subr.mxu0 0.0
    %v1096 = vand.u32 %v747, 4294901760
    %v1097 = vsub.f32 %v747, %v1096
    %v1098 = vand.u32 %v1097, 4294901760
    %1099 = vmatpush1.msra.mxu0 %v1098
    %1100 = vmatprep.subr.mxu0 0.0
    %1101 = vmatpush2.msra.mxu0 0.0
    %1102 = vmatprep.subr.mxu0 0.0
    %1103 = vmatpush2.msra.mxu0 0.0
    %1104 = vmatprep.subr.mxu0 0.0
    %1105 = vmatpush2.msra.mxu0 0.0
    %1106 = vmatprep.subr.mxu0 0.0
    %1107 = vmatpush2.msra.mxu0 0.0
    %1108 = vmatprep.subr.mxu0 0.0
    %1109 = vmatpush2.msra.mxu0 0.0
    %1110 = vmatprep.subr.mxu0 0.0
    %1111 = vmatpush2.msra.mxu0 0.0
    %1112 = vmatprep.subr.mxu0 0.0
    %1113 = vmatpush2.msra.mxu0 0.0
    %1114 = vmatprep.subr.mxu0 0.0
    %1115 = vmatpush2.msra.mxu0 0.0
    %1116 = vmatprep.subr.mxu0 0.0
    %1117 = vmatpush2.msra.mxu0 0.0
    %1118 = vmatprep.subr.mxu0 0.0
    %1119 = vmatpush2.msra.mxu0 0.0
    %1120 = vmatprep.subr.mxu0 0.0
    %1121 = vmatpush2.msra.mxu0 0.0
    %1122 = vmatprep.subr.mxu0 0.0
    %1123 = vmatpush2.msra.mxu0 0.0
    %1124 = vmatprep.subr.mxu0 0.0
    %1125 = vmatpush2.msra.mxu0 0.0
    %1126 = vmatprep.subr.mxu0 0.0
    %1127 = vmatpush2.msra.mxu0 0.0
    %1128 = vmatprep.subr.mxu0 0.0
    %1129 = vmatpush2.msra.mxu0 0.0
    %1130 = vmatprep.subr.mxu0 0.0
    %1131 = vmatpush2.msra.mxu0 0.0
    %1132 = vmatprep.mubr.f32.mxu0 0.0
    %v1133 = vand.u32 %v751, 4294901760
    %1134 = vmatmul.mubr.f32.gmra.mxu0 %v1133
    %v1135 = vpop.f32.mrf.mxu0
    %v1136 = vadd.f32 %v1059, %v1135
    %v1137 = vpop.f32.mrf.mxu0
    %1138 = vdwg.mxu0
    %1139 = vmatprep.subr.mxu0 0.0
    %1140 = vmatpush1.msra.mxu0 0.0
    %1141 = vmatprep.subr.mxu0 0.0
    %1142 = vmatpush1.msra.mxu0 0.0
    %1143 = vmatprep.subr.mxu0 0.0
    %1144 = vmatpush1.msra.mxu0 0.0
    %1145 = vmatprep.subr.mxu0 0.0
    %1146 = vmatpush1.msra.mxu0 0.0
    %1147 = vmatprep.subr.mxu0 0.0
    %1148 = vmatpush1.msra.mxu0 0.0
    %1149 = vmatprep.subr.mxu0 0.0
    %1150 = vmatpush1.msra.mxu0 0.0
    %1151 = vmatprep.subr.mxu0 0.0
    %1152 = vmatpush1.msra.mxu0 0.0
    %1153 = vmatprep.subr.mxu0 0.0
    %1154 = vmatpush1.msra.mxu0 0.0
    %1155 = vmatprep.subr.mxu0 0.0
    %1156 = vmatpush1.msra.mxu0 0.0
    %1157 = vmatprep.subr.mxu0 0.0
    %1158 = vmatpush1.msra.mxu0 0.0
    %1159 = vmatprep.subr.mxu0 0.0
    %1160 = vmatpush1.msra.mxu0 0.0
    %1161 = vmatprep.subr.mxu0 0.0
    %1162 = vmatpush1.msra.mxu0 0.0
    %1163 = vmatprep.subr.mxu0 0.0
    %1164 = vmatpush1.msra.mxu0 0.0
    %1165 = vmatprep.subr.mxu0 0.0
    %1166 = vmatpush1.msra.mxu0 0.0
    %1167 = vmatprep.subr.mxu0 0.0
    %v1168 = vand.u32 %v748, 4294901760
    %1169 = vmatpush1.msra.mxu0 %v1168
    %1170 = vmatprep.subr.mxu0 0.0
    %v1171 = vand.u32 %v747, 4294901760
    %1172 = vmatpush1.msra.mxu0 %v1171
    %1173 = vmatprep.subr.mxu0 0.0
    %1174 = vmatpush2.msra.mxu0 0.0
    %1175 = vmatprep.subr.mxu0 0.0
    %1176 = vmatpush2.msra.mxu0 0.0
    %1177 = vmatprep.subr.mxu0 0.0
    %1178 = vmatpush2.msra.mxu0 0.0
    %1179 = vmatprep.subr.mxu0 0.0
    %1180 = vmatpush2.msra.mxu0 0.0
    %1181 = vmatprep.subr.mxu0 0.0
    %1182 = vmatpush2.msra.mxu0 0.0
    %1183 = vmatprep.subr.mxu0 0.0
    %1184 = vmatpush2.msra.mxu0 0.0
    %1185 = vmatprep.subr.mxu0 0.0
    %1186 = vmatpush2.msra.mxu0 0.0
    %1187 = vmatprep.subr.mxu0 0.0
    %1188 = vmatpush2.msra.mxu0 0.0
    %1189 = vmatprep.subr.mxu0 0.0
    %1190 = vmatpush2.msra.mxu0 0.0
    %1191 = vmatprep.subr.mxu0 0.0
    %1192 = vmatpush2.msra.mxu0 0.0
    %1193 = vmatprep.subr.mxu0 0.0
    %1194 = vmatpush2.msra.mxu0 0.0
    %1195 = vmatprep.subr.mxu0 0.0
    %1196 = vmatpush2.msra.mxu0 0.0
    %1197 = vmatprep.subr.mxu0 0.0
    %1198 = vmatpush2.msra.mxu0 0.0
    %1199 = vmatprep.subr.mxu0 0.0
    %1200 = vmatpush2.msra.mxu0 0.0
    %1201 = vmatprep.subr.mxu0 0.0
    %1202 = vmatpush2.msra.mxu0 0.0
    %1203 = vmatprep.subr.mxu0 0.0
    %1204 = vmatpush2.msra.mxu0 0.0
    %1205 = vmatprep.mubr.f32.mxu0 0.0
    %v1206 = vand.u32 %v751, 4294901760
    %1207 = vmatmul.mubr.f32.gmra.mxu0 %v1206
    %v1208 = vpop.f32.mrf.mxu0
    %v1209 = vadd.f32 %v1136, %v1208
    %v1210 = vpop.f32.mrf.mxu0
    %1211 = vdwg.mxu0
    %v1212 = vmul.f32 %v1209, %v735
    %1213 = vst [vmem:[#allocation2] sm:$0xff] %v1212
    // Predicated region
    $region22: #{tpu_custom_call.1} parent=1 // pred_check
      _
    $region23: #{tpu_custom_call.1} parent=1 // pred_check_branch
      %1215 = sbr.rel (0) target = $region25
    $region24: #{tpu_custom_call.1} parent=1 // pred_region
      %s1217 = ssub.s32 128, 128
      %1218 = vsyncadd [#allocation3], %s1217
      %s1220 = sshll.u32 [#allocation2], 4
      %s1221 = int_to_ptr.vmem [resolvable:$true] %s1220
      %1223 = dma.vmem_to_hbm [thread:$0]  %s1221, 128, %s5, [#allocation3]
    $region25: #{tpu_custom_call.1} parent=1 // pred_fallthru
      _
    // Predicated region
    $region26: #{tpu_custom_call.1} parent=1 // pred_check
      _
    $region27: #{tpu_custom_call.1} parent=1 // pred_check_branch
      %1225 = sbr.rel (0) target = $region29
    $region28: #{tpu_custom_call.1} parent=1 // pred_region
      %1226 = dma.done [#allocation3], 128
    $region29: #{tpu_custom_call.1} parent=1 // pred_fallthru
      _
    %1227 = vsyncpa [#allocation3], 1

</llo_original>
